<compile_context>
chip_gen: v6e
topology: v6e:2x2x1
jax: 0.10.0
libtpu: 0.0.40
codegen_flags: <defaults>
</compile_context>

<pallas_src>
import functools

import jax
import jax.numpy as jnp
from jax.experimental import pallas as pl
from jax.experimental.pallas import tpu as pltpu


def _sum_over_time_kernel(x_ref, sum_ref, *, t_block, t_total):
    """Accumulate sum over the time axis into a resident (1, B*C) f32 output."""
    i = pl.program_id(0)

    @pl.when(i == 0)
    def _():
        sum_ref[...] = jnp.zeros_like(sum_ref)

    # f32 only for the mean accumulation (input stays in its native dtype in HBM).
    x = x_ref[...].astype(jnp.float32)

    rem = t_total % t_block
    if rem != 0:
        # Mask the garbage rows of the padded final tile (static no-op otherwise).
        row = jax.lax.broadcasted_iota(jnp.int32, x.shape, 0)
        limit = jnp.where(i == pl.num_programs(0) - 1, rem, t_block)
        x = jnp.where(row < limit, x, 0.0)

    sum_ref[...] += jnp.sum(x, axis=0, keepdims=True)


def _gate_mul_kernel(x_ref, gate_ref, o_ref):
    """out = x * gate, in the input dtype (gate pre-cast once in the wrapper)."""
    o_ref[...] = (x_ref[...] * gate_ref[...]).astype(o_ref.dtype)


def efficient_channel_attention(x, weight, bias, kernel_size=5):
    """x: (T, B, C); weight: (K, 1, 1); bias: (1,).  Returns (T, B, C)."""
    T, B, C = x.shape
    K = kernel_size
    pad = (K - 1) // 2
    BC = B * C

    # Lane-dense view: channels*batch on the lane (last) axis; free for contiguous x.
    x2 = x.reshape(T, BC)

    # Time-tile sizing: ~2 MiB per input tile -> ~8 MiB with double-buffered in+out,
    # comfortably inside every generation's scoped VMEM.
    bytes_per_row = BC * x.dtype.itemsize
    t_block = max(1, (2 * 1024 * 1024) // max(bytes_per_row, 1))
    if t_block >= T:
        t_block = T                              # full extent is always legal
    else:
        t_block = max(8, (t_block // 8) * 8)     # keep sublane dim a multiple of 8
    num_t = pl.cdiv(T, t_block)

    vmem_limit = 32 * 1024 * 1024

    # ---- Stage 1 (Pallas): tiled, pipelined sum over time -> (1, B*C) f32 ----
    sum_kernel = functools.partial(_sum_over_time_kernel, t_block=t_block, t_total=T)
    x_sum = pl.pallas_call(
        sum_kernel,
        out_shape=jax.ShapeDtypeStruct((1, BC), jnp.float32),
        grid_spec=pltpu.PrefetchScalarGridSpec(
            num_scalar_prefetch=0,
            grid=(num_t,),
            in_specs=[pl.BlockSpec((t_block, BC), lambda i: (i, 0))],
            out_specs=pl.BlockSpec((1, BC), lambda i: (0, 0)),
        ),
        compiler_params=pltpu.CompilerParams(
            dimension_semantics=("arbitrary",),
            vmem_limit_bytes=vmem_limit,
        ),
    )(x2)

    # ---- Tiny gate: mean -> 5-tap shifted-add conv over C (zero pad) -> sigmoid.
    # O(K*B*C) work on the reduced vector; done in plain XLA (perf-review-sanctioned),
    # which also keeps the conv taps as hoisted scalar broadcasts.
    w = weight.reshape(K).astype(jnp.float32)
    b = bias.reshape(()).astype(jnp.float32)
    y = x_sum.reshape(B, C) / jnp.float32(T)                    # mean over time
    y_pad = jnp.pad(y, ((0, 0), (pad, pad)))                    # zero pad along C
    z = b + sum(w[k] * y_pad[:, k:k + C] for k in range(K))     # conv_tbc semantics
    gate = jax.nn.sigmoid(z).reshape(1, BC).astype(x.dtype)     # cast once

    # ---- Stage 2 (Pallas): tiled, pipelined gating multiply over time ----
    out2 = pl.pallas_call(
        _gate_mul_kernel,
        out_shape=jax.ShapeDtypeStruct((T, BC), x.dtype),
        grid_spec=pltpu.PrefetchScalarGridSpec(
            num_scalar_prefetch=0,
            grid=(num_t,),
            in_specs=[
                pl.BlockSpec((t_block, BC), lambda i: (i, 0)),   # x tile
                pl.BlockSpec((1, BC), lambda i: (0, 0)),         # gate (resident)
            ],
            out_specs=pl.BlockSpec((t_block, BC), lambda i: (i, 0)),
        ),
        compiler_params=pltpu.CompilerParams(
            dimension_semantics=("parallel",),                   # 2 TCs on v7x
            vmem_limit_bytes=vmem_limit,
        ),
    )(x2, gate)

    return out2.reshape(T, B, C)


if __name__ == "__main__":
    key = jax.random.PRNGKey(0)
    kx, kw, kb = jax.random.split(key, 3)

    T, B, C = 8, 2, 16           # (time, batch, channels)
    K = 5

    x = jax.random.normal(kx, (T, B, C), dtype=jnp.float32)

    # Deterministic params mirroring ConvTBC(1, 1, kernel_size=5):
    # weight (K, in=1, out=1), bias (1,), uniform in [-1/sqrt(fan_in), 1/sqrt(fan_in)], fan_in=1.
    bound = 1.0
    weight = jax.random.uniform(kw, (K, 1, 1), minval=-bound, maxval=bound, dtype=jnp.float32)
    bias = jax.random.uniform(kb, (1,), minval=-bound, maxval=bound, dtype=jnp.float32)

    out = efficient_channel_attention(x, weight, bias, kernel_size=K)
    out = jax.block_until_ready(out)

    # Pure-JAX reference (mirrors torch: mean -> conv_tbc over channel axis -> sigmoid -> gate).
    pad = (K - 1) // 2
    y_ref = jnp.mean(x, axis=0)                              # (B, C)
    y_pad = jnp.pad(y_ref, ((0, 0), (pad, pad)))
    z_ref = bias[0] + sum(weight[k, 0, 0] * y_pad[:, k:k + C] for k in range(K))
    ref = x * jax.nn.sigmoid(z_ref)[None, :, :]

    assert out.shape == x.shape and out.dtype == x.dtype
    assert jnp.allclose(out, ref, atol=1e-5, rtol=1e-5), "mismatch vs reference"
    print("KERNEL_OK")
</pallas_src>

<mosaic_0001>
module attributes {stable_mosaic.version = 11 : i64} {
  func.func @_sum_over_time_kernel(%arg0: i32, %arg1: memref<8x32xf32, #tpu.memory_space<vmem>>, %arg2: memref<1x32xf32, #tpu.memory_space<vmem>>) attributes {dimension_semantics = [#tpu.dimension_semantics<arbitrary>], iteration_bounds = array<i64: 1>, scalar_prefetch = 0 : i64, scratch_operands = 0 : i64, tpu.core_type = #tpu.core_type<tc>, window_params = [{transform_indices = @transform_0, window_bounds = array<i64: 8, 32>}, {pipeline_mode = #tpu.pipeline_mode<synchronous>, transform_indices = @transform_1, window_bounds = array<i64: 1, 32>}]} {
    %c0_i32 = arith.constant 0 : i32
    %0 = arith.cmpi eq, %arg0, %c0_i32 : i32
    %1 = arith.extui %0 : i1 to i32
    %c0_i32_0 = arith.constant 0 : i32
    %2 = arith.cmpi ne, %1, %c0_i32_0 : i32
    scf.if %2 {
      %cst_6 = arith.constant 0.000000e+00 : f32
      %9 = vector.broadcast %cst_6 : f32 to vector<1x32xf32>
      %c0_7 = arith.constant 0 : index
      %c0_8 = arith.constant 0 : index
      %10 = vector.load %arg2[%c0_7, %c0_8] : memref<1x32xf32, #tpu.memory_space<vmem>>, vector<1x32xf32>
      tpu.vector_store %arg2[%c0_7, %c0_8], %9 {strides = array<i32>} : memref<1x32xf32, #tpu.memory_space<vmem>>, vector<1x32xf32>,
    } else {
    }
    %c0 = arith.constant 0 : index
    %c0_1 = arith.constant 0 : index
    %3 = vector.load %arg1[%c0, %c0_1] : memref<8x32xf32, #tpu.memory_space<vmem>>, vector<8x32xf32>
    %c0_2 = arith.constant 0 : index
    %c0_3 = arith.constant 0 : index
    %4 = vector.load %arg2[%c0_2, %c0_3] : memref<1x32xf32, #tpu.memory_space<vmem>>, vector<1x32xf32>
    %cst = arith.constant dense<0.000000e+00> : vector<32xf32>
    %5 = vector.multi_reduction <add>, %3, %cst [0] : vector<8x32xf32> to vector<32xf32>
    %6 = vector.shape_cast %5 : vector<32xf32> to vector<1x32xf32>
    %7 = arith.addf %4, %6 : vector<1x32xf32>
    %c0_4 = arith.constant 0 : index
    %c0_5 = arith.constant 0 : index
    %8 = vector.load %arg2[%c0_4, %c0_5] : memref<1x32xf32, #tpu.memory_space<vmem>>, vector<1x32xf32>
    tpu.vector_store %arg2[%c0_4, %c0_5], %7 {strides = array<i32>} : memref<1x32xf32, #tpu.memory_space<vmem>>, vector<1x32xf32>,
    return
  }
  func.func @transform_0(%arg0: i32) -> (i32, i32) {
    %c0_i32 = arith.constant 0 : i32
    %c0_i32_0 = arith.constant 0 : i32
    return %arg0, %c0_i32 : i32, i32
  }
  func.func @transform_1(%arg0: i32) -> (i32, i32) {
    %c0_i32 = arith.constant 0 : i32
    %c0_i32_0 = arith.constant 0 : i32
    %c0_i32_1 = arith.constant 0 : i32
    return %c0_i32, %c0_i32_0 : i32, i32
  }
}

</mosaic_0001>

<llo_original>
// kernel: tpu_custom_call.1
$region0: #{tpu_custom_call.1}
  #allocation0 [shape = 'u32[]', space=smem, size = 0x4, offset = 0x4, fixed_abs, tag = 'smem constant byte address 0x4 - core index']
  #allocation1 [shape = 'u32[144,128]{1,0:T(1,128)}', space=vmem, size = 0x12000, scoped, tag = 'internal scratch']
  %s0 = inlined_call_operand.hbm [shape: f32[8,32], index: 0, kind: input, shape index: {}]
  %s1 = inlined_call_operand.hbm [shape: f32[1,32], index: 1, kind: output, shape index: {}]
  %s2 = sld [smem:[#allocation0]]
  $region22: #{tpu_custom_call.1} parent=0
    _
  %s4 = ssub.s32 1, %s2
  %s5 = scalar_select 0, %s4, %s2
  $region1: #{tpu_custom_call.1} parent=0
    #allocation2 [shape = 'u8[4096]{0}', space=vmem, size = 0x1000, scoped, tag = 'input window, operand 0, single buffered']
    #allocation3 [shape = 's32[1]{0}', space=sflag, size = 0x4, scoped, tag = 'scoped memory for tpu_custom_call.1']
    #allocation4 [shape = 's32[1]{0}', space=sflag, size = 0x4, scoped, tag = 'scoped memory for tpu_custom_call.1']
    #allocation5 [shape = 'u8[512]{0}', space=vmem, size = 0x400, scoped, tag = 'output window, operand 0, single buffered']
    %6 = vsyncpa [#allocation3], 0
    %7 = vsyncpa [#allocation4], 0
    // Predicated region
    $region2: #{tpu_custom_call.1} parent=1 // pred_check
      _
    $region3: #{tpu_custom_call.1} parent=1 // pred_check_branch
      %9 = sbr.rel (0) target = $region5
    $region4: #{tpu_custom_call.1} parent=1 // pred_region
      %s11 = ssub.s32 128, 128
      %12 = vsyncadd [#allocation3], %s11
      %s14 = sshll.u32 [#allocation2], 4
      %s15 = int_to_ptr.vmem [resolvable:$true] %s14
      %17 = dma.hbm_to_vmem [thread:$0]  %s0, 128, %s15, [#allocation3]
    $region5: #{tpu_custom_call.1} parent=1 // pred_fallthru
      _
    // Predicated region
    $region6: #{tpu_custom_call.1} parent=1 // pred_check
      _
    $region7: #{tpu_custom_call.1} parent=1 // pred_check_branch
      %19 = sbr.rel (0) target = $region9
    $region8: #{tpu_custom_call.1} parent=1 // pred_region
      %20 = dma.done [#allocation3], 128
    $region9: #{tpu_custom_call.1} parent=1 // pred_fallthru
      _
    %p21 = scmp.eq.s32.totalorder 0, 0
    // Predicated region
    $region10: #{tpu_custom_call.1} parent=1 // pred_check
      %p22 = pneg %p21
    $region11: #{tpu_custom_call.1} parent=1 // pred_check_branch
      %24 = sbr.rel (%p22) target = $region13
    $region12: #{tpu_custom_call.1} parent=1 // pred_region
      %vm25 = vcmask 253952
      %26 = vst.msk [vmem:[#allocation5] sm:$0x1] %vm25, 0.0
    $region13: #{tpu_custom_call.1} parent=1 // pred_fallthru
      _
    %v27 = vld [vmem:[#allocation2] sm:$0xff]
    %v28 = vld [vmem:[#allocation5] sm:$0x1]
    %vm29 = vcmask 261120
    %v30 = vsel %vm29, %v27, 0.0
    %v31 = vrot.slane %v30, 4
    %v32 = vadd.f32 %v30, %v31
    %v33 = vrot.slane %v32, 2
    %v34 = vadd.f32 %v32, %v33
    %v35 = vrot.slane %v34, 1
    %v36 = vadd.f32 %v34, %v35
    %v37 = vadd.f32 %v28, %v36
    %vm38 = vcmask 253952
    %39 = vst.msk [vmem:[#allocation5] sm:$0x1] %vm38, %v37
    // Predicated region
    $region14: #{tpu_custom_call.1} parent=1 // pred_check
      _
    $region15: #{tpu_custom_call.1} parent=1 // pred_check_branch
      %41 = sbr.rel (0) target = $region17
    $region16: #{tpu_custom_call.1} parent=1 // pred_region
      %s43 = ssub.s32 16, 16
      %44 = vsyncadd [#allocation4], %s43
      %s46 = sshll.u32 [#allocation5], 4
      %s47 = int_to_ptr.vmem [resolvable:$true] %s46
      %49 = dma.vmem_to_hbm [thread:$0]  %s47, 16, %s1, [#allocation4]
    $region17: #{tpu_custom_call.1} parent=1 // pred_fallthru
      _
    // Predicated region
    $region18: #{tpu_custom_call.1} parent=1 // pred_check
      _
    $region19: #{tpu_custom_call.1} parent=1 // pred_check_branch
      %51 = sbr.rel (0) target = $region21
    $region20: #{tpu_custom_call.1} parent=1 // pred_region
      %52 = dma.done [#allocation4], 16
    $region21: #{tpu_custom_call.1} parent=1 // pred_fallthru
      _
    %53 = vsyncpa [#allocation3], 1
    %54 = vsyncpa [#allocation4], 1

</llo_original>
